<compile_context>
chip_gen: v7x
topology: tpu7x:2x2x1
jax: 0.10.0
libtpu: 0.0.40
codegen_flags: <defaults>
</compile_context>

<pallas_src>
import functools

import jax
import jax.numpy as jnp
from jax import lax
from jax.experimental import pallas as pl
from jax.experimental.pallas import tpu as pltpu


# ----------------------------- helpers -------------------------------------

def _tile(dim, target, align):
    """Largest multiple of `align` dividing `dim` that is <= target (or full dim)."""
    if dim <= target:
        return dim
    best = None
    t = align
    while t <= target:
        if dim % t == 0:
            best = t
        t += align
    return dim if best is None else best


# ----------------------------- Pallas kernels ------------------------------

def _matmul_bias_kernel(x_ref, w_ref, b_ref, o_ref, acc_ref, *, activation):
    # o = act(x @ w + b), K-accumulated in f32 VMEM scratch.
    k = pl.program_id(2)

    @pl.when(k == 0)
    def _():
        acc_ref[...] = jnp.zeros_like(acc_ref)

    acc_ref[...] += jnp.dot(x_ref[...], w_ref[...],
                            preferred_element_type=jnp.float32)

    @pl.when(k == pl.num_programs(2) - 1)
    def _():
        y = acc_ref[...] + b_ref[...]
        if activation == "gelu":
            # TODO(synk): HF DistilBERT uses exact (erf) GELU; tanh approx used here.
            y = jax.nn.gelu(y, approximate=True)
        o_ref[...] = y.astype(o_ref.dtype)


def _matmul_bias_res_ln_kernel(x_ref, w_ref, b_ref, r_ref, g_ref, beta_ref,
                               o_ref, acc_ref, *, eps):
    # o = LayerNorm(residual + x @ w + b) * gamma + beta, fused epilogue.
    # N (=hidden) is NOT tiled so the LN reduction stays inside one block.
    k = pl.program_id(1)

    @pl.when(k == 0)
    def _():
        acc_ref[...] = jnp.zeros_like(acc_ref)

    acc_ref[...] += jnp.dot(x_ref[...], w_ref[...],
                            preferred_element_type=jnp.float32)

    @pl.when(k == pl.num_programs(1) - 1)
    def _():
        y = acc_ref[...] + b_ref[...] + r_ref[...].astype(jnp.float32)
        mean = jnp.mean(y, axis=-1, keepdims=True)
        var = jnp.mean((y - mean) ** 2, axis=-1, keepdims=True)
        o_ref[...] = ((y - mean) * lax.rsqrt(var + eps) * g_ref[...]
                      + beta_ref[...]).astype(o_ref.dtype)


def _add_ln_kernel(x_ref, r_ref, g_ref, b_ref, o_ref, *, eps):
    # o = LayerNorm(x + r) * g + b   (embeddings)
    y = x_ref[...].astype(jnp.float32) + r_ref[...].astype(jnp.float32)
    mean = jnp.mean(y, axis=-1, keepdims=True)
    var = jnp.mean((y - mean) ** 2, axis=-1, keepdims=True)
    o_ref[...] = ((y - mean) * lax.rsqrt(var + eps) * g_ref[...]
                  + b_ref[...]).astype(o_ref.dtype)


def _attn_kernel(q_ref, k_ref, v_ref, m_ref, o_ref, *, hpg, d_head, scale):
    # One (batch, head-group) per grid step. q/k/v/o blocks are (1, S, hpg*dH),
    # sliced head-by-head inside the kernel (static slices).
    mask = m_ref[0]                                   # (1, S) f32: 1 keep / 0 mask
    bias = (mask - 1.0) * 1e9                         # 0 keep / -1e9 masked
    for h in range(hpg):
        lo = h * d_head
        q = q_ref[0, :, lo:lo + d_head]               # (S, dH) bf16
        k = k_ref[0, :, lo:lo + d_head]
        v = v_ref[0, :, lo:lo + d_head]
        # contract on dH without forming k.T
        s = lax.dot_general(q, k, (((1,), (1,)), ((), ())),
                            preferred_element_type=jnp.float32) * scale
        s = s + bias
        s = s - jnp.max(s, axis=-1, keepdims=True)
        p = jnp.exp(s)
        denom = jnp.sum(p, axis=-1, keepdims=True)
        p = p * pl.reciprocal(denom, approx=True)     # EUP reciprocal, no VALU divide
        o = lax.dot_general(p.astype(v.dtype), v, (((1,), (0,)), ((), ())),
                            preferred_element_type=jnp.float32)
        o_ref[0, :, lo:lo + d_head] = o.astype(o_ref.dtype)


# ----------------------------- wrappers -------------------------------------

def matmul_bias(x, w, b, *, activation=None, tm=256, tn=256, tk=512):
    """y = act(x @ w + b); x:(M,K) bf16, w:(K,N) bf16, b:(N,) f32 -> (M,N) bf16."""
    M, K = x.shape
    N = w.shape[1]
    tm = _tile(M, tm, 8)
    tn = _tile(N, tn, 128)
    tk = _tile(K, tk, 128)
    kern = functools.partial(_matmul_bias_kernel, activation=activation)
    return pl.pallas_call(
        kern,
        out_shape=jax.ShapeDtypeStruct((M, N), jnp.bfloat16),
        grid=(M // tm, N // tn, K // tk),
        in_specs=[
            pl.BlockSpec((tm, tk), lambda i, j, k: (i, k)),
            pl.BlockSpec((tk, tn), lambda i, j, k: (k, j)),
            pl.BlockSpec((1, tn), lambda i, j, k: (0, j)),
        ],
        out_specs=pl.BlockSpec((tm, tn), lambda i, j, k: (i, j)),
        scratch_shapes=[pltpu.VMEM((tm, tn), jnp.float32)],
        compiler_params=pltpu.CompilerParams(
            dimension_semantics=("parallel", "parallel", "arbitrary")),
    )(x, w, b.reshape(1, N))


def matmul_bias_residual_ln(x, w, b, residual, gamma, beta, *,
                            eps=1e-12, tm=256, tk=512):
    """y = LN(residual + x @ w + b)*gamma + beta; N (=hidden) kept untiled for LN."""
    M, K = x.shape
    N = w.shape[1]
    tm = _tile(M, tm, 8)
    tk = _tile(K, tk, 128)
    kern = functools.partial(_matmul_bias_res_ln_kernel, eps=eps)
    return pl.pallas_call(
        kern,
        out_shape=jax.ShapeDtypeStruct((M, N), jnp.bfloat16),
        grid=(M // tm, K // tk),
        in_specs=[
            pl.BlockSpec((tm, tk), lambda i, k: (i, k)),
            pl.BlockSpec((tk, N), lambda i, k: (k, 0)),
            pl.BlockSpec((1, N), lambda i, k: (0, 0)),
            pl.BlockSpec((tm, N), lambda i, k: (i, 0)),
            pl.BlockSpec((1, N), lambda i, k: (0, 0)),
            pl.BlockSpec((1, N), lambda i, k: (0, 0)),
        ],
        out_specs=pl.BlockSpec((tm, N), lambda i, k: (i, 0)),
        scratch_shapes=[pltpu.VMEM((tm, N), jnp.float32)],
        compiler_params=pltpu.CompilerParams(
            dimension_semantics=("parallel", "arbitrary")),
    )(x, w, b.reshape(1, N), residual, gamma.reshape(1, N), beta.reshape(1, N))


def add_layernorm(x, r, gamma, beta, *, eps=1e-12, tm=256):
    """LayerNorm(x + r), tiled over rows; output bf16 for the downstream matmuls."""
    M, H = x.shape
    tm = _tile(M, tm, 8)
    kern = functools.partial(_add_ln_kernel, eps=eps)
    return pl.pallas_call(
        kern,
        out_shape=jax.ShapeDtypeStruct((M, H), jnp.bfloat16),
        grid=(M // tm,),
        in_specs=[
            pl.BlockSpec((tm, H), lambda i: (i, 0)),
            pl.BlockSpec((tm, H), lambda i: (i, 0)),
            pl.BlockSpec((1, H), lambda i: (0, 0)),
            pl.BlockSpec((1, H), lambda i: (0, 0)),
        ],
        out_specs=pl.BlockSpec((tm, H), lambda i: (i, 0)),
        compiler_params=pltpu.CompilerParams(dimension_semantics=("parallel",)),
    )(x, r, gamma.reshape(1, H), beta.reshape(1, H))


def mha_attention(qkv, attention_mask, *, n_heads, hidden):
    """Multi-head attention driven directly from the fused (B, S, 3H) qkv slab.

    Grid = (batch, head_group); head groups are packed so each q/k/v/o block is a
    multiple of 128 lanes wide (lane-dense loads/stores, no XLA head transposes).
    """
    B, S, _ = qkv.shape
    d_head = hidden // n_heads

    hpg = n_heads
    for cand in range(1, n_heads + 1):
        if n_heads % cand == 0 and (cand * d_head) % 128 == 0:
            hpg = cand
            break
    gw = hpg * d_head
    assert gw % 128 == 0, "head-group width must be a multiple of 128 lanes"
    n_groups = hidden // gw

    mask = attention_mask.astype(jnp.float32).reshape(B, 1, S)
    kern = functools.partial(_attn_kernel, hpg=hpg, d_head=d_head,
                             scale=1.0 / (d_head ** 0.5))
    out = pl.pallas_call(
        kern,
        out_shape=jax.ShapeDtypeStruct((B, S, hidden), jnp.bfloat16),
        grid=(B, n_groups),
        in_specs=[
            pl.BlockSpec((1, S, gw), lambda b, g: (b, 0, g)),                  # q
            pl.BlockSpec((1, S, gw), lambda b, g: (b, 0, n_groups + g)),       # k
            pl.BlockSpec((1, S, gw), lambda b, g: (b, 0, 2 * n_groups + g)),   # v
            pl.BlockSpec((1, 1, S), lambda b, g: (b, 0, 0)),                   # mask
        ],
        out_specs=pl.BlockSpec((1, S, gw), lambda b, g: (b, 0, g)),
        compiler_params=pltpu.CompilerParams(
            dimension_semantics=("parallel", "parallel")),
    )(qkv, qkv, qkv, mask)
    return out


# ----------------------------- model ----------------------------------------

def init_params(key, *, vocab, max_pos, hidden, ffn, n_layers, num_labels):
    wdt = jnp.bfloat16  # matmul weights in bf16 (f32 MXU accumulation in-kernel)

    def nrm(k, shape, dtype=jnp.float32):
        return (0.02 * jax.random.normal(k, shape, dtype=jnp.float32)).astype(dtype)

    keys = iter(jax.random.split(key, 8 + n_layers * 16))
    params = {
        "word_emb": nrm(next(keys), (vocab, hidden)),
        "pos_emb": nrm(next(keys), (max_pos, hidden)),
        "emb_ln_g": jnp.ones((hidden,), jnp.float32),
        "emb_ln_b": jnp.zeros((hidden,), jnp.float32),
        "cls_w": nrm(next(keys), (hidden, num_labels)),
        "cls_b": jnp.zeros((num_labels,), jnp.float32),
        "layers": [],
    }
    for _ in range(n_layers):
        # Q/K/V fused on the out-features axis: one (H, 3H) matmul per layer.
        qkv_w = jnp.concatenate(
            [nrm(next(keys), (hidden, hidden), wdt) for _ in range(3)], axis=1)
        qkv_b = jnp.concatenate(
            [nrm(next(keys), (hidden,)) for _ in range(3)], axis=0)
        layer = {
            "qkv_w": qkv_w, "qkv_b": qkv_b,
            "o_w": nrm(next(keys), (hidden, hidden), wdt),
            "o_b": nrm(next(keys), (hidden,)),
            "sa_ln_g": jnp.ones((hidden,), jnp.float32),
            "sa_ln_b": jnp.zeros((hidden,), jnp.float32),
            "ffn1_w": nrm(next(keys), (hidden, ffn), wdt),
            "ffn1_b": nrm(next(keys), (ffn,)),
            "ffn2_w": nrm(next(keys), (ffn, hidden), wdt),
            "ffn2_b": nrm(next(keys), (hidden,)),
            "out_ln_g": jnp.ones((hidden,), jnp.float32),
            "out_ln_b": jnp.zeros((hidden,), jnp.float32),
        }
        params["layers"].append(layer)
    return params


def distilbert_multilabel_forward(params, input_ids, attention_mask, n_heads):
    B, S = input_ids.shape
    H = params["word_emb"].shape[1]
    M = B * S

    # --- embeddings: gather stays in XLA (tiny table); add + LN fused in Pallas ---
    word = jnp.take(params["word_emb"], input_ids, axis=0).reshape(M, H)
    pos = jnp.broadcast_to(params["pos_emb"][:S][None], (B, S, H)).reshape(M, H)
    x = add_layernorm(word, pos, params["emb_ln_g"], params["emb_ln_b"])  # (M,H) bf16

    # --- transformer blocks ---
    for lyr in params["layers"]:
        # fused QKV projection: (M,H) @ (H,3H) read x once
        qkv = matmul_bias(x, lyr["qkv_w"], lyr["qkv_b"])                  # (M,3H) bf16
        ctx = mha_attention(qkv.reshape(B, S, 3 * H), attention_mask,
                            n_heads=n_heads, hidden=H)                    # (B,S,H) bf16
        # output projection + residual + LayerNorm fused epilogue
        x = matmul_bias_residual_ln(ctx.reshape(M, H), lyr["o_w"], lyr["o_b"],
                                    x, lyr["sa_ln_g"], lyr["sa_ln_b"])
        # FFN: GELU fused into matmul1 epilogue; residual+LN fused into matmul2
        h = matmul_bias(x, lyr["ffn1_w"], lyr["ffn1_b"], activation="gelu")
        x = matmul_bias_residual_ln(h, lyr["ffn2_w"], lyr["ffn2_b"],
                                    x, lyr["out_ln_g"], lyr["out_ln_b"])

    # --- CLS classifier: (B x 5) is microscopic -> plain XLA per perf review ---
    cls = x.reshape(B, S, H)[:, 0].astype(jnp.float32)                    # (B,H)
    logits = cls @ params["cls_w"] + params["cls_b"]                      # (B,labels)
    return logits


# ----------------------------- main ------------------------------------------

if __name__ == "__main__":
    # Small DistilBERT-like config (dims chosen lane-aligned: H multiple of 128).
    B, S = 2, 16
    HIDDEN, N_HEADS, N_LAYERS = 128, 2, 2
    FFN = 4 * HIDDEN
    VOCAB, MAX_POS = 100, 32
    NUM_LABELS = 5

    key = jax.random.PRNGKey(0)
    k_param, k_ids = jax.random.split(key)
    params = init_params(k_param, vocab=VOCAB, max_pos=MAX_POS, hidden=HIDDEN,
                         ffn=FFN, n_layers=N_LAYERS, num_labels=NUM_LABELS)

    input_ids = jax.random.randint(k_ids, (B, S), 0, VOCAB, dtype=jnp.int32)
    attention_mask = jnp.concatenate(
        [jnp.ones((1, S), jnp.int32),
         jnp.concatenate([jnp.ones((1, S - 4), jnp.int32),
                          jnp.zeros((1, 4), jnp.int32)], axis=1)], axis=0)

    logits = distilbert_multilabel_forward(params, input_ids, attention_mask,
                                           N_HEADS)
    logits = jax.block_until_ready(logits)
    assert logits.shape == (B, NUM_LABELS)
    assert bool(jnp.all(jnp.isfinite(logits)))
    print("KERNEL_OK")
</pallas_src>

<mosaic_0001>
module attributes {stable_mosaic.version = 11 : i64} {
  func.func @_add_ln_kernel(%arg0: i32, %arg1: memref<32x128xf32, #tpu.memory_space<vmem>>, %arg2: memref<32x128xf32, #tpu.memory_space<vmem>>, %arg3: memref<1x128xf32, #tpu.memory_space<vmem>>, %arg4: memref<1x128xf32, #tpu.memory_space<vmem>>, %arg5: memref<32x128xbf16, #tpu.memory_space<vmem>>) attributes {dimension_semantics = [#tpu.dimension_semantics<parallel>], iteration_bounds = array<i64: 1>, scalar_prefetch = 0 : i64, scratch_operands = 0 : i64, tpu.core_type = #tpu.core_type<tc>, window_params = [{transform_indices = @transform_0, window_bounds = array<i64: 32, 128>}, {transform_indices = @transform_1, window_bounds = array<i64: 32, 128>}, {pipeline_mode = #tpu.pipeline_mode<synchronous>, transform_indices = @transform_2, window_bounds = array<i64: 1, 128>}, {pipeline_mode = #tpu.pipeline_mode<synchronous>, transform_indices = @transform_3, window_bounds = array<i64: 1, 128>}, {transform_indices = @transform_4, window_bounds = array<i64: 32, 128>}]} {
    %c0 = arith.constant 0 : index
    %c0_0 = arith.constant 0 : index
    %0 = vector.load %arg1[%c0, %c0_0] : memref<32x128xf32, #tpu.memory_space<vmem>>, vector<32x128xf32>
    %c0_1 = arith.constant 0 : index
    %c0_2 = arith.constant 0 : index
    %1 = vector.load %arg2[%c0_1, %c0_2] : memref<32x128xf32, #tpu.memory_space<vmem>>, vector<32x128xf32>
    %2 = arith.addf %0, %1 : vector<32x128xf32>
    %cst = arith.constant dense<0.000000e+00> : vector<32xf32>
    %3 = vector.multi_reduction <add>, %2, %cst [1] : vector<32x128xf32> to vector<32xf32>
    %4 = vector.shape_cast %3 : vector<32xf32> to vector<32x1xf32>
    %cst_3 = arith.constant 1.280000e+02 : f32
    %5 = vector.broadcast %cst_3 : f32 to vector<32x1xf32>
    %6 = arith.divf %4, %5 : vector<32x1xf32>
    %7 = vector.broadcast %6 : vector<32x1xf32> to vector<32x128xf32>
    %8 = arith.subf %2, %7 : vector<32x128xf32>
    %9 = arith.mulf %8, %8 : vector<32x128xf32>
    %cst_4 = arith.constant dense<0.000000e+00> : vector<32xf32>
    %10 = vector.multi_reduction <add>, %9, %cst_4 [1] : vector<32x128xf32> to vector<32xf32>
    %11 = vector.shape_cast %10 : vector<32xf32> to vector<32x1xf32>
    %cst_5 = arith.constant 1.280000e+02 : f32
    %12 = vector.broadcast %cst_5 : f32 to vector<32x1xf32>
    %13 = arith.divf %11, %12 : vector<32x1xf32>
    %14 = vector.broadcast %6 : vector<32x1xf32> to vector<32x128xf32>
    %15 = arith.subf %2, %14 : vector<32x128xf32>
    %cst_6 = arith.constant 9.99999996E-13 : f32
    %16 = vector.broadcast %cst_6 : f32 to vector<32x1xf32>
    %17 = arith.addf %13, %16 : vector<32x1xf32>
    %18 = math.rsqrt %17 : vector<32x1xf32>
    %19 = vector.broadcast %18 : vector<32x1xf32> to vector<32x128xf32>
    %20 = arith.mulf %15, %19 : vector<32x128xf32>
    %c0_7 = arith.constant 0 : index
    %c0_8 = arith.constant 0 : index
    %21 = vector.load %arg3[%c0_7, %c0_8] : memref<1x128xf32, #tpu.memory_space<vmem>>, vector<1x128xf32>
    %22 = vector.broadcast %21 : vector<1x128xf32> to vector<32x128xf32>
    %23 = arith.mulf %20, %22 : vector<32x128xf32>
    %c0_9 = arith.constant 0 : index
    %c0_10 = arith.constant 0 : index
    %24 = vector.load %arg4[%c0_9, %c0_10] : memref<1x128xf32, #tpu.memory_space<vmem>>, vector<1x128xf32>
    %25 = vector.broadcast %24 : vector<1x128xf32> to vector<32x128xf32>
    %26 = arith.addf %23, %25 : vector<32x128xf32>
    %27 = arith.truncf %26 : vector<32x128xf32> to vector<32x128xbf16>
    %c0_11 = arith.constant 0 : index
    %c0_12 = arith.constant 0 : index
    %28 = vector.load %arg5[%c0_11, %c0_12] : memref<32x128xbf16, #tpu.memory_space<vmem>>, vector<32x128xbf16>
    tpu.vector_store %arg5[%c0_11, %c0_12], %27 {strides = array<i32>} : memref<32x128xbf16, #tpu.memory_space<vmem>>, vector<32x128xbf16>,
    return
  }
  func.func @transform_0(%arg0: i32) -> (i32, i32) {
    %c0_i32 = arith.constant 0 : i32
    %c0_i32_0 = arith.constant 0 : i32
    return %arg0, %c0_i32 : i32, i32
  }
  func.func @transform_1(%arg0: i32) -> (i32, i32) {
    %c0_i32 = arith.constant 0 : i32
    %c0_i32_0 = arith.constant 0 : i32
    return %arg0, %c0_i32 : i32, i32
  }
  func.func @transform_2(%arg0: i32) -> (i32, i32) {
    %c0_i32 = arith.constant 0 : i32
    %c0_i32_0 = arith.constant 0 : i32
    %c0_i32_1 = arith.constant 0 : i32
    return %c0_i32, %c0_i32_0 : i32, i32
  }
  func.func @transform_3(%arg0: i32) -> (i32, i32) {
    %c0_i32 = arith.constant 0 : i32
    %c0_i32_0 = arith.constant 0 : i32
    %c0_i32_1 = arith.constant 0 : i32
    return %c0_i32, %c0_i32_0 : i32, i32
  }
  func.func @transform_4(%arg0: i32) -> (i32, i32) {
    %c0_i32 = arith.constant 0 : i32
    %c0_i32_0 = arith.constant 0 : i32
    return %arg0, %c0_i32 : i32, i32
  }
}

</mosaic_0001>

<llo_original>
// kernel: tpu_custom_call.1
$region0: #{tpu_custom_call.1}
  #allocation0 [shape = 'u32[]', space=smem, size = 0x4, offset = 0x4, fixed_abs, tag = 'smem constant byte address 0x4 - core index']
  #allocation1 [shape = 'u32[144,128]{1,0:T(1,128)}', space=vmem, size = 0x12000, scoped, tag = 'internal scratch']
  %s0 = inlined_call_operand.hbm [shape: f32[32,128], index: 0, kind: input, shape index: {}]
  %s1 = inlined_call_operand.hbm [shape: f32[32,128], index: 1, kind: input, shape index: {}]
  %s2 = inlined_call_operand.vmem [shape: f32[1,128], index: 2, kind: input, shape index: {}]
  %s3 = inlined_call_operand.vmem [shape: f32[1,128], index: 3, kind: input, shape index: {}]
  %s4 = inlined_call_operand.hbm [shape: bf16[32,128], index: 4, kind: output, shape index: {}]
  %s5 = sld [smem:[#allocation0]]
  $region34: #{tpu_custom_call.1} parent=0
    _
  %s7 = ssub.s32 1, %s5
  %s8 = scalar_select 0, %s7, %s5
  $region1: #{tpu_custom_call.1} parent=0
    #allocation2 [shape = 'u8[16384]{0}', space=vmem, size = 0x4000, scoped, tag = 'input window, operand 0, single buffered']
    #allocation3 [shape = 's32[1]{0}', space=sflag, size = 0x4, scoped, tag = 'scoped memory for tpu_custom_call.1']
    #allocation4 [shape = 's32[1]{0}', space=sflag, size = 0x4, scoped, tag = 'scoped memory for tpu_custom_call.1']
    #allocation5 [shape = 'u8[16384]{0}', space=vmem, size = 0x4000, scoped, tag = 'input window, operand 1, single buffered']
    #allocation6 [shape = 's32[1]{0}', space=sflag, size = 0x4, scoped, tag = 'scoped memory for tpu_custom_call.1']
    #allocation7 [shape = 'u8[8192]{0}', space=vmem, size = 0x2000, scoped, tag = 'output window, operand 0, single buffered']
    %9 = vsyncpa [#allocation3], 0
    %10 = vsyncpa [#allocation6], 0
    %11 = vsyncpa [#allocation4], 0
    // Predicated region
    $region2: #{tpu_custom_call.1} parent=1 // pred_check
      _
    $region3: #{tpu_custom_call.1} parent=1 // pred_check_branch
      %13 = sbr.rel (0) target = $region5
    $region4: #{tpu_custom_call.1} parent=1 // pred_region
      %s15 = ssub.s32 512, 512
      %16 = vsyncadd [#allocation3], %s15
      %s17 = sshll.u32 [#allocation2], 4
      %s18 = int_to_ptr.vmem [resolvable:$true] %s17
      %23 = dma.hbm_to_vmem [thread:$0]  %s0, 512, %s18, [#allocation3], 128, 128, 8
    $region5: #{tpu_custom_call.1} parent=1 // pred_fallthru
      _
    // Predicated region
    $region6: #{tpu_custom_call.1} parent=1 // pred_check
      _
    $region7: #{tpu_custom_call.1} parent=1 // pred_check_branch
      %25 = sbr.rel (0) target = $region9
    $region8: #{tpu_custom_call.1} parent=1 // pred_region
      %s27 = ssub.s32 512, 512
      %28 = vsyncadd [#allocation6], %s27
      %s29 = sshll.u32 [#allocation5], 4
      %s30 = int_to_ptr.vmem [resolvable:$true] %s29
      %35 = dma.hbm_to_vmem [thread:$0]  %s1, 512, %s30, [#allocation6], 128, 128, 8
    $region9: #{tpu_custom_call.1} parent=1 // pred_fallthru
      _
    // Predicated region
    $region10: #{tpu_custom_call.1} parent=1 // pred_check
      _
    $region11: #{tpu_custom_call.1} parent=1 // pred_check_branch
      %37 = sbr.rel (0) target = $region13
    $region12: #{tpu_custom_call.1} parent=1 // pred_region
      _
    $region13: #{tpu_custom_call.1} parent=1 // pred_fallthru
      _
    // Predicated region
    $region14: #{tpu_custom_call.1} parent=1 // pred_check
      _
    $region15: #{tpu_custom_call.1} parent=1 // pred_check_branch
      %39 = sbr.rel (0) target = $region17
    $region16: #{tpu_custom_call.1} parent=1 // pred_region
      _
    $region17: #{tpu_custom_call.1} parent=1 // pred_fallthru
      _
    // Predicated region
    $region18: #{tpu_custom_call.1} parent=1 // pred_check
      _
    $region19: #{tpu_custom_call.1} parent=1 // pred_check_branch
      %41 = sbr.rel (0) target = $region21
    $region20: #{tpu_custom_call.1} parent=1 // pred_region
      %42 = dma.done [#allocation3], 512
    $region21: #{tpu_custom_call.1} parent=1 // pred_fallthru
      _
    // Predicated region
    $region22: #{tpu_custom_call.1} parent=1 // pred_check
      _
    $region23: #{tpu_custom_call.1} parent=1 // pred_check_branch
      %44 = sbr.rel (0) target = $region25
    $region24: #{tpu_custom_call.1} parent=1 // pred_region
      %45 = dma.done [#allocation6], 512
    $region25: #{tpu_custom_call.1} parent=1 // pred_fallthru
      _
    %v46 = vld [vmem:[#allocation2] sm:$0xff]
    %v47 = vld [vmem:[#allocation2 + $0x8] sm:$0xff]
    %v48 = vld [vmem:[#allocation2 + $0x10] sm:$0xff]
    %v49 = vld [vmem:[#allocation2 + $0x18] sm:$0xff]
    %v50 = vld [vmem:[#allocation5] sm:$0xff]
    %v51 = vld [vmem:[#allocation5 + $0x8] sm:$0xff]
    %v52 = vld [vmem:[#allocation5 + $0x10] sm:$0xff]
    %v53 = vld [vmem:[#allocation5 + $0x18] sm:$0xff]
    %v54 = vadd.f32 %v46, %v50
    %v55 = vadd.f32 %v47, %v51
    %v56 = vadd.f32 %v48, %v52
    %v57 = vadd.f32 %v49, %v53
    %58 = vadd.xlane.f32.xlu0 %v54
    %v59 = vpop.xlane.xlu0 %58
    %60 = vadd.xlane.f32.xlu0 %v55
    %v61 = vpop.xlane.xlu0 %60
    %62 = vadd.xlane.f32.xlu0 %v56
    %v63 = vpop.xlane.xlu0 %62
    %64 = vadd.xlane.f32.xlu0 %v57
    %v65 = vpop.xlane.xlu0 %64
    %v66 = vrcp.pop 128.0
    %v67 = vmul.f32 %v59, %v66
    %v68 = vmul.f32 %v61, %v66
    %v69 = vmul.f32 %v63, %v66
    %v70 = vmul.f32 %v65, %v66
    %v71 = vsub.f32 %v54, %v67
    %v72 = vsub.f32 %v55, %v68
    %v73 = vsub.f32 %v56, %v69
    %v74 = vsub.f32 %v57, %v70
    %v75 = vmul.f32 %v71, %v71
    %v76 = vmul.f32 %v72, %v72
    %v77 = vmul.f32 %v73, %v73
    %v78 = vmul.f32 %v74, %v74
    %79 = vadd.xlane.f32.xlu0 %v75
    %v80 = vpop.xlane.xlu0 %79
    %81 = vadd.xlane.f32.xlu0 %v76
    %v82 = vpop.xlane.xlu0 %81
    %83 = vadd.xlane.f32.xlu0 %v77
    %v84 = vpop.xlane.xlu0 %83
    %85 = vadd.xlane.f32.xlu0 %v78
    %v86 = vpop.xlane.xlu0 %85
    %v87 = vmul.f32 %v80, %v66
    %v88 = vmul.f32 %v82, %v66
    %v89 = vmul.f32 %v84, %v66
    %v90 = vmul.f32 %v86, %v66
    %v91 = vadd.f32 %v87, 1e-12
    %v92 = vadd.f32 %v88, 1e-12
    %v93 = vadd.f32 %v89, 1e-12
    %v94 = vadd.f32 %v90, 1e-12
    %v95 = vrsqrt.pop %v91
    %v96 = vrsqrt.pop %v92
    %v97 = vrsqrt.pop %v93
    %v98 = vrsqrt.pop %v94
    %v99 = vmul.f32 %v71, %v95
    %v100 = vmul.f32 %v72, %v96
    %v101 = vmul.f32 %v73, %v97
    %v102 = vmul.f32 %v74, %v98
    %v103 = vld [vmem:[%s2] sm:$0x1]
    %v105 = vlaneseq
    %v106 = vshrl.u32 %v105, 7
    %v107 = vsub.s32 0, %v106
    %v108 = vrot.slane %v103, %v107
    %v110 = vmul.f32 %v99, %v108
    %v111 = vmul.f32 %v100, %v108
    %v112 = vmul.f32 %v101, %v108
    %v113 = vmul.f32 %v102, %v108
    %v114 = vld [vmem:[%s3] sm:$0x1]
    %v116 = vlaneseq
    %v117 = vshrl.u32 %v116, 7
    %v118 = vsub.s32 0, %v117
    %v119 = vrot.slane %v114, %v118
    %v121 = vadd.f32 %v110, %v119
    %v122 = vadd.f32 %v111, %v119
    %v123 = vadd.f32 %v112, %v119
    %v124 = vadd.f32 %v113, %v119
    %v125 = vpack.c.bf16 %v122, %v121
    %v126 = vpack.c.bf16 %v124, %v123
    %v129 = vunpack.c.l.b16 %v125
    %v130 = vunpack.c.h.b16 %v125
    %v131 = vunpack.c.l.b16 %v126
    %v132 = vunpack.c.h.b16 %v126
    %v133 = vpack.c.b16 %v129, %v129
    %v134 = vpack.c.b16 %v130, %v130
    %v135 = vpack.c.b16 %v131, %v131
    %v136 = vpack.c.b16 %v132, %v132
    %141 = vst [vmem:[#allocation7] sm:$0xf] %v133
    %142 = vst [vmem:[#allocation7 + $0x4] sm:$0xf] %v134
    %143 = vst [vmem:[#allocation7 + $0x8] sm:$0xf] %v135
    %144 = vst [vmem:[#allocation7 + $0xc] sm:$0xf] %v136
    // Predicated region
    $region26: #{tpu_custom_call.1} parent=1 // pred_check
      _
    $region27: #{tpu_custom_call.1} parent=1 // pred_check_branch
      %146 = sbr.rel (0) target = $region29
    $region28: #{tpu_custom_call.1} parent=1 // pred_region
      %s148 = ssub.s32 256, 256
      %149 = vsyncadd [#allocation4], %s148
      %s150 = sshll.u32 [#allocation7], 4
      %s151 = int_to_ptr.vmem [resolvable:$true] %s150
      %156 = dma.vmem_to_hbm [thread:$0]  %s151, 256, %s4, [#allocation4], 64, 64, 4
    $region29: #{tpu_custom_call.1} parent=1 // pred_fallthru
      _
    // Predicated region
    $region30: #{tpu_custom_call.1} parent=1 // pred_check
      _
    $region31: #{tpu_custom_call.1} parent=1 // pred_check_branch
      %158 = sbr.rel (0) target = $region33
    $region32: #{tpu_custom_call.1} parent=1 // pred_region
      %159 = dma.done [#allocation4], 256
    $region33: #{tpu_custom_call.1} parent=1 // pred_fallthru
      _
    %160 = vsyncpa [#allocation3], 1
    %161 = vsyncpa [#allocation6], 1
    %162 = vsyncpa [#allocation4], 1

</llo_original>
